<compile_context>
chip_gen: v6e
topology: v6e:2x2x1
jax: 0.10.0
libtpu: 0.0.40
codegen_flags: <defaults>
</compile_context>

<pallas_src>
import functools
import math

import jax
import jax.numpy as jnp
import numpy as np
from jax.experimental import pallas as pl
from jax.experimental.pallas import tpu as pltpu


def _multitask_kron_kernel(x_ref, e_ref, lb_ref, o_ref):
    """One row tile of the dense Kronecker-product feature map.

    x_ref : (tm, d)         raw inputs (data features before scaling)
    e_ref : (d, t*dt_col)   0/1 lane-expansion matrix, E2[j, k*dt_col + j*t + l] = 1
    lb_ref: (1, t*dt_col)   lb[0, k*dt_col + j*t + l] = sqrt(variance) * L[k, l]
    o_ref : (tm, t*dt_col)  o[i, k*dt_col + j*t + l] = sqrt(var) * x[i, j] * L[k, l]
    """
    x = x_ref[...].astype(jnp.float32)
    # Single MXU matmul, contracting over d (cheap, linear in tm): replicates
    # each x[i, j] into every (task-row k, task-col l) lane slot of row i.
    rep = jnp.dot(x, e_ref[...], preferred_element_type=jnp.float32)
    # Kronecker multiply on the VPU; the LB row is sublane-broadcast over the
    # tile.  sqrt(variance) was folded into LB in the wrapper (hoisted).
    o_ref[...] = (rep * lb_ref[...]).astype(o_ref.dtype)


def _round_up(v, m):
    return ((v + m - 1) // m) * m


@functools.lru_cache(maxsize=None)
def _lane_expansion_matrix(d, t, dt_col):
    """Cached 0/1 selection matrix E2 with E2[j, k*dt_col + j*t + l] = 1."""
    dt = d * t
    cols = np.arange(dt_col)
    e_block = (np.arange(d)[:, None] == (cols[None, :] // t)).astype(np.float32)
    e_block[:, dt:] = 0.0                       # padded lanes select nothing
    return jnp.asarray(np.tile(e_block, (1, t)))  # (d, t * dt_col)


def _pick_row_tile(rows, d, cols, *, vmem_budget_bytes=16 * 1024 * 1024, cap=1024):
    """Largest data-row tile (multiple of 8, <= cap) fitting the VMEM budget.

    Constants no longer scale with the tile, so the tile is sized purely by the
    streamed x tile, the output tile and the in-kernel matmul intermediate.
    16 MiB accounted budget + an explicit 32 MiB vmem_limit keeps comfortable
    headroom on every generation (v5e/v6e: 128 MiB physical, v7x: 64 MiB).
    """
    rows8 = max(8, _round_up(rows, 8))
    cap = max(8, min(cap, rows8))
    best = 8
    for tm in range(8, cap + 1, 8):
        vmem_bytes = 4 * (
            2 * tm * max(d, 128)    # x tile (double buffered, lanes pad to 128)
            + 2 * tm * cols         # output tile (double buffered)
            + tm * cols             # in-kernel matmul intermediate (rep)
            + 2 * d * cols          # E2 constant (tm-independent)
            + 2 * 8 * cols          # LB pattern (sublane-padded, tm-independent)
        )
        if vmem_bytes <= vmem_budget_bytes:
            best = tm
    # Shrink to minimise tail-padding waste while keeping the same step count.
    num_tiles = pl.cdiv(rows, best)
    return max(8, _round_up(pl.cdiv(rows, num_tiles), 8))


def multitask_kernel_feature_map_forward(x, variance, task_chol, *,
                                         row_tile=None, out_dtype=None):
    """Dense forward pass of MultitaskKernelFeatureMap.

    Args:
      x: (*batch, n, d) inputs.
      variance: LinearKernel variance parameter (shape (1, 1) or scalar).
      task_chol: (t, t) lower Cholesky factor of the task covariance matrix.
      row_tile: optional override for the number of data rows per grid step.
      out_dtype: optional output dtype (e.g. jnp.bfloat16) to halve the
        HBM-write-bound part; in-kernel arithmetic stays f32.

    Returns:
      (*batch, n * t, d * t) dense Kronecker-product feature matrix.
    """
    *batch_shape, n, d = x.shape
    t = task_chol.shape[0]
    dt = d * t                                   # true per-task-block width
    out_dtype = x.dtype if out_dtype is None else jnp.dtype(out_dtype)

    # Lane-density guard: keep the kernel's output row a multiple of 128 lanes
    # so stores are unmasked vst's.  dt_col == dt whenever t*d*t % 128 == 0
    # (true for the demo), i.e. the padded path is only taken for odd shapes.
    dt_col = dt if (t * dt) % 128 == 0 else _round_up(dt, 128)
    cols = t * dt_col

    rows = math.prod(batch_shape) * n
    x2d = x.reshape(rows, d)

    tm = row_tile if row_tile is not None else _pick_row_tile(rows, d, cols)
    tm = max(8, (tm // 8) * 8)
    num_tiles = pl.cdiv(rows, tm)
    rows_pad = num_tiles * tm
    if rows_pad != rows:
        # Tail handling: pad in the wrapper instead of a divisibility assert.
        x2d = jnp.pad(x2d, ((0, rows_pad - rows), (0, 0)))

    f32 = jnp.float32
    # Hoisted sqrt: computed once here, folded into the task-Cholesky pattern.
    # TODO(synk): assumes a size-1 LinearKernel variance; a batched (B, 1, 1)
    # variance would need per-batch folding into LB.
    scale = jnp.sqrt(jnp.asarray(variance, f32).reshape(()))

    # Constants are independent of tm: E2 is cached across calls; LB is a
    # single lane row, lb[0, k*dt_col + j*t + l] = sqrt(variance) * L[k, l].
    e2 = _lane_expansion_matrix(d, t, dt_col)
    lb = jnp.broadcast_to((scale * task_chol.astype(f32))[:, None, :], (t, d, t))
    lb = lb.reshape(t, dt)
    if dt_col != dt:
        lb = jnp.pad(lb, ((0, 0), (0, dt_col - dt)))
    lb = lb.reshape(1, cols)

    cost = pl.CostEstimate(
        flops=2 * rows_pad * d * cols + rows_pad * cols,
        transcendentals=0,
        bytes_accessed=(rows_pad * d * x2d.dtype.itemsize
                        + rows_pad * cols * jnp.dtype(out_dtype).itemsize
                        + (d * cols + cols) * 4),
    )

    out2d = pl.pallas_call(
        _multitask_kron_kernel,
        out_shape=jax.ShapeDtypeStruct((rows_pad, cols), out_dtype),
        grid=(num_tiles,),
        in_specs=[
            pl.BlockSpec((tm, d), lambda i: (i, 0)),     # x rows (streamed)
            pl.BlockSpec((d, cols), lambda i: (0, 0)),   # E2 (constant block)
            pl.BlockSpec((1, cols), lambda i: (0, 0)),   # LB (constant block)
        ],
        out_specs=pl.BlockSpec((tm, cols), lambda i: (i, 0)),
        compiler_params=pltpu.CompilerParams(
            dimension_semantics=("parallel",),  # v7x: both TCs split row tiles
            vmem_limit_bytes=32 * 1024 * 1024,
        ),
        cost_estimate=cost,
    )(x2d, e2, lb)

    # (rows_pad, t*dt_col) row-major is bit-identical to (rows_pad*t, dt_col),
    # so every reshape below is layout-preserving (free); only padded rows /
    # padded lanes (if any) cost a slice.
    if rows_pad != rows:
        out2d = out2d[:rows]
    out = out2d.reshape(rows * t, dt_col)
    if dt_col != dt:
        out = out[:, :dt]
    return out.reshape(*batch_shape, n * t, dt)


class MultitaskKernelFeatureMapPallas:
    """Minimal stand-in for botorch's MultitaskKernelFeatureMap.

    data_feature_map is a LinearKernelFeatureMap: data_features = sqrt(variance) * x.
    The task kernel is an IndexKernel-style covariance B @ B.T + diag(v).
    active_dims / input & output transforms are identity in this setup.
    """

    def __init__(self, num_tasks, data_variance_value, task_covar_factor, task_var):
        self.num_tasks = num_tasks
        # gpytorch LinearKernel stores variance with shape (*batch_shape, 1, 1).
        self.data_variance = jnp.full((1, 1), data_variance_value, dtype=jnp.float32)
        task_covar = task_covar_factor @ task_covar_factor.T + jnp.diag(task_var)
        # TODO(synk): the t x t task-covariance Cholesky stays in plain JAX
        # (jnp.linalg.cholesky); it is far too small to benefit from Pallas.
        self.task_chol = jnp.linalg.cholesky(task_covar)

    def __call__(self, x):
        return multitask_kernel_feature_map_forward(
            x, self.data_variance, self.task_chol)


if __name__ == "__main__":
    key = jax.random.PRNGKey(0)
    kx, kf = jax.random.split(key)

    # Small shapes: batch=2, n=16 inputs, d=32 data features, 4 tasks.
    # Output: (2, 64, 128); kernel slab last dim t*d*t = 512 (lane-dense).
    batch, n, d, num_tasks = 2, 16, 32, 4
    x = jax.random.normal(kx, (batch, n, d), dtype=jnp.float32)

    data_variance_value = 2.5
    task_covar_factor = 0.3 * jax.random.normal(kf, (num_tasks, 2), dtype=jnp.float32)
    task_var = 0.5 + 0.1 * jnp.arange(num_tasks, dtype=jnp.float32)

    fmap = MultitaskKernelFeatureMapPallas(
        num_tasks, data_variance_value, task_covar_factor, task_var)

    out = fmap(x)
    jax.block_until_ready(out)

    # Reference: densified KroneckerProductLinearOperator(data_features, L).
    data_features = jnp.sqrt(jnp.float32(data_variance_value)) * x
    L = fmap.task_chol
    ref = jnp.einsum("bij,kl->bikjl", data_features, L).reshape(
        batch, n * num_tasks, d * num_tasks)

    assert out.shape == (batch, n * num_tasks, d * num_tasks), out.shape
    assert out.dtype == x.dtype, out.dtype
    # Tolerance covers possible reduced-precision MXU passes of the f32
    # selection matmul (the 0/1 matrix is exact; only x may lose low mantissa
    # bits); with a full-f32 matmul path the match is exact.
    assert jnp.allclose(out, ref, rtol=1e-2, atol=1e-3), float(
        jnp.max(jnp.abs(out - ref)))

    print("KERNEL_OK")
</pallas_src>

<mosaic_0001>
module attributes {stable_mosaic.version = 11 : i64} {
  func.func @_multitask_kron_kernel(%arg0: i32, %arg1: memref<32x32xf32, #tpu.memory_space<vmem>>, %arg2: memref<32x512xf32, #tpu.memory_space<vmem>>, %arg3: memref<1x512xf32, #tpu.memory_space<vmem>>, %arg4: memref<32x512xf32, #tpu.memory_space<vmem>>) attributes {dimension_semantics = [#tpu.dimension_semantics<parallel>], iteration_bounds = array<i64: 1>, scalar_prefetch = 0 : i64, scratch_operands = 0 : i64, tpu.core_type = #tpu.core_type<tc>, window_params = [{transform_indices = @transform_0, window_bounds = array<i64: 32, 32>}, {pipeline_mode = #tpu.pipeline_mode<synchronous>, transform_indices = @transform_1, window_bounds = array<i64: 32, 512>}, {pipeline_mode = #tpu.pipeline_mode<synchronous>, transform_indices = @transform_2, window_bounds = array<i64: 1, 512>}, {transform_indices = @transform_3, window_bounds = array<i64: 32, 512>}]} {
    %c0 = arith.constant 0 : index
    %c0_0 = arith.constant 0 : index
    %0 = vector.load %arg1[%c0, %c0_0] : memref<32x32xf32, #tpu.memory_space<vmem>>, vector<32x32xf32>
    %c0_1 = arith.constant 0 : index
    %c0_2 = arith.constant 0 : index
    %1 = vector.load %arg2[%c0_1, %c0_2] : memref<32x512xf32, #tpu.memory_space<vmem>>, vector<32x512xf32>
    %cst = arith.constant dense<0.000000e+00> : vector<32x512xf32>
    %2 = tpu.matmul %0, %1, %cst {dimension_numbers = #tpu.dot_dimension_numbers<[1], [0], [0], [1], [0, 0, 1, 1], [], []>} : vector<32x32xf32>, vector<32x512xf32>, vector<32x512xf32> -> vector<32x512xf32>
    %c0_3 = arith.constant 0 : index
    %c0_4 = arith.constant 0 : index
    %3 = vector.load %arg3[%c0_3, %c0_4] : memref<1x512xf32, #tpu.memory_space<vmem>>, vector<1x512xf32>
    %4 = vector.broadcast %3 : vector<1x512xf32> to vector<32x512xf32>
    %5 = arith.mulf %2, %4 : vector<32x512xf32>
    %c0_5 = arith.constant 0 : index
    %c0_6 = arith.constant 0 : index
    %6 = vector.load %arg4[%c0_5, %c0_6] : memref<32x512xf32, #tpu.memory_space<vmem>>, vector<32x512xf32>
    tpu.vector_store %arg4[%c0_5, %c0_6], %5 {strides = array<i32>} : memref<32x512xf32, #tpu.memory_space<vmem>>, vector<32x512xf32>,
    return
  }
  func.func @transform_0(%arg0: i32) -> (i32, i32) {
    %c0_i32 = arith.constant 0 : i32
    %c0_i32_0 = arith.constant 0 : i32
    return %arg0, %c0_i32 : i32, i32
  }
  func.func @transform_1(%arg0: i32) -> (i32, i32) {
    %c0_i32 = arith.constant 0 : i32
    %c0_i32_0 = arith.constant 0 : i32
    %c0_i32_1 = arith.constant 0 : i32
    return %c0_i32, %c0_i32_0 : i32, i32
  }
  func.func @transform_2(%arg0: i32) -> (i32, i32) {
    %c0_i32 = arith.constant 0 : i32
    %c0_i32_0 = arith.constant 0 : i32
    %c0_i32_1 = arith.constant 0 : i32
    return %c0_i32, %c0_i32_0 : i32, i32
  }
  func.func @transform_3(%arg0: i32) -> (i32, i32) {
    %c0_i32 = arith.constant 0 : i32
    %c0_i32_0 = arith.constant 0 : i32
    return %arg0, %c0_i32 : i32, i32
  }
}

</mosaic_0001>

<llo_original>
// kernel: tpu_custom_call.1
$region0: #{tpu_custom_call.1}
  #allocation0 [shape = 'u32[]', space=smem, size = 0x4, offset = 0x4, fixed_abs, tag = 'smem constant byte address 0x4 - core index']
  #allocation1 [shape = 'u32[144,128]{1,0:T(1,128)}', space=vmem, size = 0x12000, scoped, tag = 'internal scratch']
  %s0 = inlined_call_operand.hbm [shape: f32[32,32], index: 0, kind: input, shape index: {}]
  %s1 = inlined_call_operand.hbm [shape: f32[32,512], index: 1, kind: input, shape index: {}]
  %s2 = inlined_call_operand.hbm [shape: f32[1,512], index: 2, kind: input, shape index: {}]
  %s3 = inlined_call_operand.hbm [shape: f32[32,512], index: 3, kind: output, shape index: {}]
  %s4 = sld [smem:[#allocation0]]
  $region34: #{tpu_custom_call.1} parent=0
    _
  %s6 = ssub.s32 1, %s4
  %s7 = scalar_select 0, %s6, %s4
  $region1: #{tpu_custom_call.1} parent=0
    #allocation2 [shape = 'u8[16384]{0}', space=vmem, size = 0x4000, scoped, tag = 'input window, operand 0, single buffered']
    #allocation3 [shape = 's32[1]{0}', space=sflag, size = 0x4, scoped, tag = 'scoped memory for tpu_custom_call.1']
    #allocation4 [shape = 's32[1]{0}', space=sflag, size = 0x4, scoped, tag = 'scoped memory for tpu_custom_call.1']
    #allocation5 [shape = 'u8[65536]{0}', space=vmem, size = 0x10000, scoped, tag = 'input window, operand 1, single buffered']
    #allocation6 [shape = 's32[1]{0}', space=sflag, size = 0x4, scoped, tag = 'scoped memory for tpu_custom_call.1']
    #allocation7 [shape = 'u8[2048]{0}', space=vmem, size = 0x800, scoped, tag = 'input window, operand 2, single buffered']
    #allocation8 [shape = 'u8[65536]{0}', space=vmem, size = 0x10000, scoped, tag = 'output window, operand 0, single buffered']
    %8 = vsyncpa [#allocation3], 0
    %9 = vsyncpa [#allocation6], 0
    %10 = vsyncpa [#allocation4], 0
    // Predicated region
    $region2: #{tpu_custom_call.1} parent=1 // pred_check
      _
    $region3: #{tpu_custom_call.1} parent=1 // pred_check_branch
      %12 = sbr.rel (0) target = $region5
    $region4: #{tpu_custom_call.1} parent=1 // pred_region
      %s14 = ssub.s32 512, 512
      %15 = vsyncadd [#allocation3], %s14
      %s16 = sshll.u32 [#allocation2], 4
      %s17 = int_to_ptr.vmem [resolvable:$true] %s16
      %22 = dma.hbm_to_vmem [thread:$0]  %s0, 512, %s17, [#allocation3], 128, 128, 8
    $region5: #{tpu_custom_call.1} parent=1 // pred_fallthru
      _
    // Predicated region
    $region6: #{tpu_custom_call.1} parent=1 // pred_check
      _
    $region7: #{tpu_custom_call.1} parent=1 // pred_check_branch
      %24 = sbr.rel (0) target = $region9
    $region8: #{tpu_custom_call.1} parent=1 // pred_region
      %s26 = ssub.s32 2048, 2048
      %27 = vsyncadd [#allocation6], %s26
      %s28 = sshll.u32 [#allocation5], 4
      %s29 = int_to_ptr.vmem [resolvable:$true] %s28
      %34 = dma.hbm_to_vmem [thread:$0]  %s1, 2048, %s29, [#allocation6], 512, 512, 32
    $region9: #{tpu_custom_call.1} parent=1 // pred_fallthru
      _
    // Predicated region
    $region10: #{tpu_custom_call.1} parent=1 // pred_check
      _
    $region11: #{tpu_custom_call.1} parent=1 // pred_check_branch
      %36 = sbr.rel (0) target = $region13
    $region12: #{tpu_custom_call.1} parent=1 // pred_region
      %s38 = ssub.s32 64, 64
      %39 = vsyncadd [#allocation6], %s38
      %s41 = sshll.u32 [#allocation7], 4
      %s42 = int_to_ptr.vmem [resolvable:$true] %s41
      %44 = dma.hbm_to_vmem [thread:$0]  %s2, 64, %s42, [#allocation6]
    $region13: #{tpu_custom_call.1} parent=1 // pred_fallthru
      _
    // Predicated region
    $region14: #{tpu_custom_call.1} parent=1 // pred_check
      _
    $region15: #{tpu_custom_call.1} parent=1 // pred_check_branch
      %46 = sbr.rel (0) target = $region17
    $region16: #{tpu_custom_call.1} parent=1 // pred_region
      %47 = dma.done [#allocation3], 512
    $region17: #{tpu_custom_call.1} parent=1 // pred_fallthru
      _
    // Predicated region
    $region18: #{tpu_custom_call.1} parent=1 // pred_check
      _
    $region19: #{tpu_custom_call.1} parent=1 // pred_check_branch
      %49 = sbr.rel (0) target = $region21
    $region20: #{tpu_custom_call.1} parent=1 // pred_region
      %50 = dma.done [#allocation6], 2048
    $region21: #{tpu_custom_call.1} parent=1 // pred_fallthru
      _
    // Predicated region
    $region22: #{tpu_custom_call.1} parent=1 // pred_check
      _
    $region23: #{tpu_custom_call.1} parent=1 // pred_check_branch
      %52 = sbr.rel (0) target = $region25
    $region24: #{tpu_custom_call.1} parent=1 // pred_region
      %53 = dma.done [#allocation6], 64
    $region25: #{tpu_custom_call.1} parent=1 // pred_fallthru
      _
    %v54 = vld [vmem:[#allocation2] sm:$0xff]
    %v55 = vld [vmem:[#allocation2 + $0x8] sm:$0xff]
    %v56 = vld [vmem:[#allocation2 + $0x10] sm:$0xff]
    %v57 = vld [vmem:[#allocation2 + $0x18] sm:$0xff]
    %v58 = vld [vmem:[#allocation5] sm:$0xff]
    %v59 = vld [vmem:[#allocation5 + $0x8] sm:$0xff]
    %v60 = vld [vmem:[#allocation5 + $0x10] sm:$0xff]
    %v61 = vld [vmem:[#allocation5 + $0x18] sm:$0xff]
    %v62 = vld [vmem:[#allocation5 + $0x20] sm:$0xff]
    %v63 = vld [vmem:[#allocation5 + $0x28] sm:$0xff]
    %v64 = vld [vmem:[#allocation5 + $0x30] sm:$0xff]
    %v65 = vld [vmem:[#allocation5 + $0x38] sm:$0xff]
    %v66 = vld [vmem:[#allocation5 + $0x40] sm:$0xff]
    %v67 = vld [vmem:[#allocation5 + $0x48] sm:$0xff]
    %v68 = vld [vmem:[#allocation5 + $0x50] sm:$0xff]
    %v69 = vld [vmem:[#allocation5 + $0x58] sm:$0xff]
    %v70 = vld [vmem:[#allocation5 + $0x60] sm:$0xff]
    %v71 = vld [vmem:[#allocation5 + $0x68] sm:$0xff]
    %v72 = vld [vmem:[#allocation5 + $0x70] sm:$0xff]
    %v73 = vld [vmem:[#allocation5 + $0x78] sm:$0xff]
    %vm74 = vcmask 261120
    %v76 = vsel %vm74, %v54, 0
    %v79 = vsel %vm74, %v55, 0
    %v82 = vsel %vm74, %v56, 0
    %v85 = vsel %vm74, %v57, 0
    %87 = vmatprep.subr.mxu0 0.0
    %88 = vmatpush1.msra.mxu0 0.0
    %89 = vmatprep.subr.mxu0 0.0
    %90 = vmatpush1.msra.mxu0 0.0
    %91 = vmatprep.subr.mxu0 0.0
    %92 = vmatpush1.msra.mxu0 0.0
    %93 = vmatprep.subr.mxu0 0.0
    %94 = vmatpush1.msra.mxu0 0.0
    %95 = vmatprep.subr.mxu0 0.0
    %96 = vmatpush1.msra.mxu0 0.0
    %97 = vmatprep.subr.mxu0 0.0
    %98 = vmatpush1.msra.mxu0 0.0
    %99 = vmatprep.subr.mxu0 0.0
    %100 = vmatpush1.msra.mxu0 0.0
    %101 = vmatprep.subr.mxu0 0.0
    %102 = vmatpush1.msra.mxu0 0.0
    %103 = vmatprep.subr.mxu0 0.0
    %104 = vmatpush1.msra.mxu0 0.0
    %105 = vmatprep.subr.mxu0 0.0
    %106 = vmatpush1.msra.mxu0 0.0
    %107 = vmatprep.subr.mxu0 0.0
    %108 = vmatpush1.msra.mxu0 0.0
    %109 = vmatprep.subr.mxu0 0.0
    %110 = vmatpush1.msra.mxu0 0.0
    %111 = vmatprep.subr.mxu0 %v71
    %112 = vmatpush1.msra.mxu0 %v70
    %113 = vmatprep.subr.mxu0 %v67
    %114 = vmatpush1.msra.mxu0 %v66
    %115 = vmatprep.subr.mxu0 %v63
    %116 = vmatpush1.msra.mxu0 %v62
    %117 = vmatprep.subr.mxu0 %v59
    %118 = vmatpush1.msra.mxu0 %v58
    %119 = vmatprep.subr.mxu0 0.0
    %120 = vmatpush2.msra.mxu0 0.0
    %121 = vmatprep.subr.mxu0 0.0
    %122 = vmatpush2.msra.mxu0 0.0
    %123 = vmatprep.subr.mxu0 0.0
    %124 = vmatpush2.msra.mxu0 0.0
    %125 = vmatprep.subr.mxu0 0.0
    %126 = vmatpush2.msra.mxu0 0.0
    %127 = vmatprep.subr.mxu0 0.0
    %128 = vmatpush2.msra.mxu0 0.0
    %129 = vmatprep.subr.mxu0 0.0
    %130 = vmatpush2.msra.mxu0 0.0
    %131 = vmatprep.subr.mxu0 0.0
    %132 = vmatpush2.msra.mxu0 0.0
    %133 = vmatprep.subr.mxu0 0.0
    %134 = vmatpush2.msra.mxu0 0.0
    %135 = vmatprep.subr.mxu0 0.0
    %136 = vmatpush2.msra.mxu0 0.0
    %137 = vmatprep.subr.mxu0 0.0
    %138 = vmatpush2.msra.mxu0 0.0
    %139 = vmatprep.subr.mxu0 0.0
    %140 = vmatpush2.msra.mxu0 0.0
    %141 = vmatprep.subr.mxu0 0.0
    %142 = vmatpush2.msra.mxu0 0.0
    %143 = vmatprep.subr.mxu0 0.0
    %144 = vmatpush2.msra.mxu0 0.0
    %145 = vmatprep.subr.mxu0 0.0
    %146 = vmatpush2.msra.mxu0 0.0
    %147 = vmatprep.subr.mxu0 0.0
    %148 = vmatpush2.msra.mxu0 0.0
    %149 = vmatprep.subr.mxu0 0.0
    %150 = vmatpush2.msra.mxu0 0.0
    %151 = vmatprep.mubr.f32.mxu0 0.0
    %152 = vmatmul.mubr.f32.gmra.mxu0 %v76
    %v153 = vpop.f32.mrf.mxu0
    %v154 = vadd.f32 0.0, %v153
    %v155 = vpop.f32.mrf.mxu0
    %v156 = vadd.f32 0.0, %v155
    %157 = vmatprep.mubr.f32.mxu0 0.0
    %158 = vmatmul.mubr.f32.gmra.mxu0 %v79
    %v159 = vpop.f32.mrf.mxu0
    %v160 = vadd.f32 0.0, %v159
    %v161 = vpop.f32.mrf.mxu0
    %v162 = vadd.f32 0.0, %v161
    %163 = vmatprep.mubr.f32.mxu0 0.0
    %164 = vmatmul.mubr.f32.gmra.mxu0 %v82
    %v165 = vpop.f32.mrf.mxu0
    %v166 = vadd.f32 0.0, %v165
    %v167 = vpop.f32.mrf.mxu0
    %v168 = vadd.f32 0.0, %v167
    %169 = vmatprep.mubr.f32.mxu0 0.0
    %170 = vmatmul.mubr.f32.gmra.mxu0 %v85
    %v171 = vpop.f32.mrf.mxu0
    %v172 = vadd.f32 0.0, %v171
    %v173 = vpop.f32.mrf.mxu0
    %v174 = vadd.f32 0.0, %v173
    %175 = vdwg.mxu0
    %176 = vmatprep.subr.mxu0 0.0
    %177 = vmatpush1.msra.mxu0 0.0
    %178 = vmatprep.subr.mxu0 0.0
    %179 = vmatpush1.msra.mxu0 0.0
    %180 = vmatprep.subr.mxu0 0.0
    %181 = vmatpush1.msra.mxu0 0.0
    %182 = vmatprep.subr.mxu0 0.0
    %183 = vmatpush1.msra.mxu0 0.0
    %184 = vmatprep.subr.mxu0 0.0
    %185 = vmatpush1.msra.mxu0 0.0
    %186 = vmatprep.subr.mxu0 0.0
    %187 = vmatpush1.msra.mxu0 0.0
    %188 = vmatprep.subr.mxu0 0.0
    %189 = vmatpush1.msra.mxu0 0.0
    %190 = vmatprep.subr.mxu0 0.0
    %191 = vmatpush1.msra.mxu0 0.0
    %192 = vmatprep.subr.mxu0 0.0
    %193 = vmatpush1.msra.mxu0 0.0
    %194 = vmatprep.subr.mxu0 0.0
    %195 = vmatpush1.msra.mxu0 0.0
    %196 = vmatprep.subr.mxu0 0.0
    %197 = vmatpush1.msra.mxu0 0.0
    %198 = vmatprep.subr.mxu0 0.0
    %199 = vmatpush1.msra.mxu0 0.0
    %200 = vmatprep.subr.mxu0 %v73
    %201 = vmatpush1.msra.mxu0 %v72
    %202 = vmatprep.subr.mxu0 %v69
    %203 = vmatpush1.msra.mxu0 %v68
    %204 = vmatprep.subr.mxu0 %v65
    %205 = vmatpush1.msra.mxu0 %v64
    %206 = vmatprep.subr.mxu0 %v61
    %207 = vmatpush1.msra.mxu0 %v60
    %208 = vmatprep.subr.mxu0 0.0
    %209 = vmatpush2.msra.mxu0 0.0
    %210 = vmatprep.subr.mxu0 0.0
    %211 = vmatpush2.msra.mxu0 0.0
    %212 = vmatprep.subr.mxu0 0.0
    %213 = vmatpush2.msra.mxu0 0.0
    %214 = vmatprep.subr.mxu0 0.0
    %215 = vmatpush2.msra.mxu0 0.0
    %216 = vmatprep.subr.mxu0 0.0
    %217 = vmatpush2.msra.mxu0 0.0
    %218 = vmatprep.subr.mxu0 0.0
    %219 = vmatpush2.msra.mxu0 0.0
    %220 = vmatprep.subr.mxu0 0.0
    %221 = vmatpush2.msra.mxu0 0.0
    %222 = vmatprep.subr.mxu0 0.0
    %223 = vmatpush2.msra.mxu0 0.0
    %224 = vmatprep.subr.mxu0 0.0
    %225 = vmatpush2.msra.mxu0 0.0
    %226 = vmatprep.subr.mxu0 0.0
    %227 = vmatpush2.msra.mxu0 0.0
    %228 = vmatprep.subr.mxu0 0.0
    %229 = vmatpush2.msra.mxu0 0.0
    %230 = vmatprep.subr.mxu0 0.0
    %231 = vmatpush2.msra.mxu0 0.0
    %232 = vmatprep.subr.mxu0 0.0
    %233 = vmatpush2.msra.mxu0 0.0
    %234 = vmatprep.subr.mxu0 0.0
    %235 = vmatpush2.msra.mxu0 0.0
    %236 = vmatprep.subr.mxu0 0.0
    %237 = vmatpush2.msra.mxu0 0.0
    %238 = vmatprep.subr.mxu0 0.0
    %239 = vmatpush2.msra.mxu0 0.0
    %240 = vmatprep.mubr.f32.mxu0 0.0
    %241 = vmatmul.mubr.f32.gmra.mxu0 %v76
    %v242 = vpop.f32.mrf.mxu0
    %v243 = vadd.f32 0.0, %v242
    %v244 = vpop.f32.mrf.mxu0
    %v245 = vadd.f32 0.0, %v244
    %246 = vmatprep.mubr.f32.mxu0 0.0
    %247 = vmatmul.mubr.f32.gmra.mxu0 %v79
    %v248 = vpop.f32.mrf.mxu0
    %v249 = vadd.f32 0.0, %v248
    %v250 = vpop.f32.mrf.mxu0
    %v251 = vadd.f32 0.0, %v250
    %252 = vmatprep.mubr.f32.mxu0 0.0
    %253 = vmatmul.mubr.f32.gmra.mxu0 %v82
    %v254 = vpop.f32.mrf.mxu0
    %v255 = vadd.f32 0.0, %v254
    %v256 = vpop.f32.mrf.mxu0
    %v257 = vadd.f32 0.0, %v256
    %258 = vmatprep.mubr.f32.mxu0 0.0
    %259 = vmatmul.mubr.f32.gmra.mxu0 %v85
    %v260 = vpop.f32.mrf.mxu0
    %v261 = vadd.f32 0.0, %v260
    %v262 = vpop.f32.mrf.mxu0
    %v263 = vadd.f32 0.0, %v262
    %264 = vdwg.mxu0
    %v265 = vld [vmem:[#allocation7] sm:$0xf]
    %v267 = vlaneseq
    %v268 = vshrl.u32 %v267, 7
    %v269 = vsub.s32 0, %v268
    %v270 = vrot.slane %v265, %v269
    %v271 = vlaneseq
    %v272 = vshrl.u32 %v271, 7
    %v273 = vsub.s32 1, %v272
    %v274 = vrot.slane %v265, %v273
    %v275 = vlaneseq
    %v276 = vshrl.u32 %v275, 7
    %v277 = vsub.s32 2, %v276
    %v278 = vrot.slane %v265, %v277
    %v279 = vlaneseq
    %v280 = vshrl.u32 %v279, 7
    %v281 = vsub.s32 3, %v280
    %v282 = vrot.slane %v265, %v281
    %v287 = vmul.f32 %v154, %v270
    %v288 = vmul.f32 %v156, %v274
    %v289 = vmul.f32 %v243, %v278
    %v290 = vmul.f32 %v245, %v282
    %v291 = vmul.f32 %v160, %v270
    %v292 = vmul.f32 %v162, %v274
    %v293 = vmul.f32 %v249, %v278
    %v294 = vmul.f32 %v251, %v282
    %v295 = vmul.f32 %v166, %v270
    %v296 = vmul.f32 %v168, %v274
    %v297 = vmul.f32 %v255, %v278
    %v298 = vmul.f32 %v257, %v282
    %v299 = vmul.f32 %v172, %v270
    %v300 = vmul.f32 %v174, %v274
    %v301 = vmul.f32 %v261, %v278
    %v302 = vmul.f32 %v263, %v282
    %303 = vst [vmem:[#allocation8] sm:$0xff] %v287
    %304 = vst [vmem:[#allocation8 + $0x8] sm:$0xff] %v288
    %305 = vst [vmem:[#allocation8 + $0x10] sm:$0xff] %v289
    %306 = vst [vmem:[#allocation8 + $0x18] sm:$0xff] %v290
    %307 = vst [vmem:[#allocation8 + $0x20] sm:$0xff] %v291
    %308 = vst [vmem:[#allocation8 + $0x28] sm:$0xff] %v292
    %309 = vst [vmem:[#allocation8 + $0x30] sm:$0xff] %v293
    %310 = vst [vmem:[#allocation8 + $0x38] sm:$0xff] %v294
    %311 = vst [vmem:[#allocation8 + $0x40] sm:$0xff] %v295
    %312 = vst [vmem:[#allocation8 + $0x48] sm:$0xff] %v296
    %313 = vst [vmem:[#allocation8 + $0x50] sm:$0xff] %v297
    %314 = vst [vmem:[#allocation8 + $0x58] sm:$0xff] %v298
    %315 = vst [vmem:[#allocation8 + $0x60] sm:$0xff] %v299
    %316 = vst [vmem:[#allocation8 + $0x68] sm:$0xff] %v300
    %317 = vst [vmem:[#allocation8 + $0x70] sm:$0xff] %v301
    %318 = vst [vmem:[#allocation8 + $0x78] sm:$0xff] %v302
    // Predicated region
    $region26: #{tpu_custom_call.1} parent=1 // pred_check
      _
    $region27: #{tpu_custom_call.1} parent=1 // pred_check_branch
      %320 = sbr.rel (0) target = $region29
    $region28: #{tpu_custom_call.1} parent=1 // pred_region
      %s322 = ssub.s32 2048, 2048
      %323 = vsyncadd [#allocation4], %s322
      %s324 = sshll.u32 [#allocation8], 4
      %s325 = int_to_ptr.vmem [resolvable:$true] %s324
      %330 = dma.vmem_to_hbm [thread:$0]  %s325, 2048, %s3, [#allocation4], 512, 512, 32
    $region29: #{tpu_custom_call.1} parent=1 // pred_fallthru
      _
    // Predicated region
    $region30: #{tpu_custom_call.1} parent=1 // pred_check
      _
    $region31: #{tpu_custom_call.1} parent=1 // pred_check_branch
      %332 = sbr.rel (0) target = $region33
    $region32: #{tpu_custom_call.1} parent=1 // pred_region
      %333 = dma.done [#allocation4], 2048
    $region33: #{tpu_custom_call.1} parent=1 // pred_fallthru
      _
    %334 = vsyncpa [#allocation3], 1
    %335 = vsyncpa [#allocation6], 1
    %336 = vsyncpa [#allocation4], 1

</llo_original>
